<compile_context>
chip_gen: v7x
topology: tpu7x:2x2x1
jax: 0.10.0
libtpu: 0.0.40
codegen_flags: <defaults>
</compile_context>

<pallas_src>
import functools

import jax
import jax.numpy as jnp
from jax.experimental import pallas as pl
from jax.experimental.pallas import tpu as pltpu

EPS = 1e-10

_BLOCK_BYTES_BUDGET = 4 * 1024 * 1024   # target bytes per input block (double-buffered)
_MAX_ROWS_TILE = 1024                   # sublane rows per block in the 4D layout
_MAX_LANES_3D = 32768                   # lanes per block in the 3D fallback layout


def _channel_loss(x, c):
    """Per-pixel -log(1 - softmax(x)[channel c-1] + eps); channel axis is axis=1."""
    x = x.astype(jnp.float32)
    m = jnp.max(x, axis=1, keepdims=True)        # per-pixel max over channels
    e = jnp.exp(x - m)
    e_last = e[:, c - 1]                          # leading-dim index: free
    if c > 1:
        s_other = jnp.sum(e[:, :c - 1], axis=1)
    else:
        s_other = jnp.zeros_like(e_last)
    s = s_other + e_last
    # -log(1 - p_last + eps) == log(s) - log(s_other + eps*s)
    return jnp.log(s) - jnp.log(s_other + EPS * s)


def _genloss_kernel_4d(x_ref, o_ref, acc_ref, *, c, rows_total, rows_tile, needs_mask):
    """x block: (b_tile, C, rows_tile, 128); spatial dense on sublanes+lanes."""
    j = pl.program_id(1)

    @pl.when(j == 0)
    def _():
        acc_ref[...] = jnp.zeros_like(acc_ref)

    loss = _channel_loss(x_ref[...], c)          # (b_tile, rows_tile, 128)

    if needs_mask:
        # Mask only the loss (not x): OOB garbage stays confined per-lane and the
        # select discards it (safe even for inf/NaN).
        row = j * rows_tile + jax.lax.broadcasted_iota(
            jnp.int32, (1, rows_tile, 128), 1)
        loss = jnp.where(row < rows_total, loss, 0.0)

    acc_ref[...] += loss                         # pure VPU accumulation

    @pl.when(j == pl.num_programs(1) - 1)
    def _():
        o_ref[...] = jnp.broadcast_to(jnp.sum(acc_ref[...]), (1, 8, 128))


def _genloss_kernel_3d(x_ref, o_ref, acc_ref, *, c, hw_total, hw_tile, needs_mask):
    """Fallback block: (1, C, hw_tile); spatial dense on lanes only."""
    j = pl.program_id(1)

    @pl.when(j == 0)
    def _():
        acc_ref[...] = jnp.zeros_like(acc_ref)

    loss = _channel_loss(x_ref[...], c)          # (1, hw_tile)

    if needs_mask:
        col = j * hw_tile + jax.lax.broadcasted_iota(jnp.int32, (1, hw_tile), 1)
        loss = jnp.where(col < hw_total, loss, 0.0)

    acc_ref[...] += loss

    @pl.when(j == pl.num_programs(1) - 1)
    def _():
        o_ref[...] = jnp.broadcast_to(jnp.sum(acc_ref[...]), (1, 8, 128))


def _largest_batch_fold(b, per_b_bytes, budget):
    """Largest divisor d of b with d*per_b_bytes <= budget, keeping >=2 outer chunks
    (so the 'parallel' axis can still feed both v7x TensorCores) when b >= 2."""
    best = 1
    for d in range(1, b + 1):
        if b % d != 0 or d * per_b_bytes > budget:
            continue
        if b >= 2 and b // d < 2:
            continue
        best = d
    return best


def gen_loss(x_nchw):
    """x_nchw: (B, C, H, W) float (f32 or bf16). Returns scalar float32 loss."""
    B, C, H, W = x_nchw.shape
    HW = H * W
    total_n = B * HW
    itemsize = jnp.dtype(x_nchw.dtype).itemsize

    if HW % 128 == 0:
        # Preferred (B, C, rows, 128) layout: free metadata reshape, no HBM pass.
        rows = HW // 128
        x_in = x_nchw.reshape(B, C, rows, 128)

        max_rows = max(16, min(_MAX_ROWS_TILE,
                               (_BLOCK_BYTES_BUDGET // (C * 128 * 4)) // 16 * 16))
        if rows <= max_rows:
            rows_tile, n_j = rows, 1
        else:
            rows_tile = max_rows
            n_j = pl.cdiv(rows, rows_tile)
        needs_mask = (n_j * rows_tile != rows)

        b_tile = 1
        if n_j == 1 and B > 1:
            b_tile = _largest_batch_fold(B, C * rows_tile * 128 * 4,
                                         _BLOCK_BYTES_BUDGET)
        n_outer = B // b_tile

        kernel = functools.partial(
            _genloss_kernel_4d, c=C, rows_total=rows, rows_tile=rows_tile,
            needs_mask=needs_mask)
        in_spec = pl.BlockSpec((b_tile, C, rows_tile, 128),
                               lambda i, j: (i, 0, j, 0))
        acc_shape = (b_tile, rows_tile, 128)
    else:
        # Fallback: lane-dense (B, C, HW) with tail masking on the lane axis.
        x_in = x_nchw.reshape(B, C, HW)
        if HW <= 128:
            hw_tile, n_j = HW, 1
        else:
            max_lanes = max(128, min(_MAX_LANES_3D,
                                     (_BLOCK_BYTES_BUDGET // (C * 4)) // 128 * 128))
            hw_tile = min(max_lanes, ((HW + 127) // 128) * 128)
            n_j = pl.cdiv(HW, hw_tile)
        needs_mask = (n_j * hw_tile != HW)
        b_tile, n_outer = 1, B

        kernel = functools.partial(
            _genloss_kernel_3d, c=C, hw_total=HW, hw_tile=hw_tile,
            needs_mask=needs_mask)
        in_spec = pl.BlockSpec((1, C, hw_tile), lambda i, j: (i, 0, j))
        acc_shape = (1, hw_tile)

    cost = pl.CostEstimate(
        flops=int(B * HW * (3 * C + 8)),
        transcendentals=int(B * HW * (C + 2)),
        bytes_accessed=int(B * C * HW * itemsize + n_outer * 8 * 128 * 4),
    )

    partials = pl.pallas_call(
        kernel,
        out_shape=jax.ShapeDtypeStruct((n_outer, 8, 128), jnp.float32),
        grid_spec=pltpu.PrefetchScalarGridSpec(
            num_scalar_prefetch=0,
            grid=(n_outer, n_j),
            in_specs=[in_spec],
            out_specs=pl.BlockSpec((1, 8, 128), lambda i, j: (i, 0, 0)),
            scratch_shapes=[pltpu.VMEM(acc_shape, jnp.float32)],
        ),
        compiler_params=pltpu.CompilerParams(
            dimension_semantics=("parallel", "arbitrary"),
            vmem_limit_bytes=32 * 1024 * 1024,
        ),
        cost_estimate=cost,
    )(x_in)

    # Per-chunk partial sums -> scalar mean (tiny XLA reduction).
    return jnp.sum(partials[:, 0, 0]) / jnp.float32(total_n)


def gen_loss_ref(x_nchw):
    """Pure-JAX reference mirroring the PyTorch module."""
    p = jax.nn.softmax(x_nchw.astype(jnp.float32), axis=1)
    return jnp.mean(-jnp.log(1.0 - p[:, -1] + EPS))


if __name__ == "__main__":
    key = jax.random.PRNGKey(0)
    k1, k2 = jax.random.split(key)

    # Main path: (B, C, H, W) with H*W a multiple of 128 -> 4D sublane-dense layout.
    x = jax.random.normal(k1, (2, 4, 16, 16), dtype=jnp.float32)
    out = jax.block_until_ready(gen_loss(x))
    ref = jax.block_until_ready(gen_loss_ref(x))
    assert jnp.allclose(out, ref, rtol=1e-5, atol=1e-5), (out, ref)

    # Fallback path: H*W not a multiple of 128 -> masked 3D layout.
    x2 = jax.random.normal(k2, (2, 3, 15, 15), dtype=jnp.float32)
    out2 = jax.block_until_ready(gen_loss(x2))
    ref2 = jax.block_until_ready(gen_loss_ref(x2))
    assert jnp.allclose(out2, ref2, rtol=1e-5, atol=1e-5), (out2, ref2)

    print("KERNEL_OK")
</pallas_src>

<mosaic_0001>
module attributes {stable_mosaic.version = 11 : i64} {
  func.func @_genloss_kernel_4d(%arg0: i32, %arg1: i32, %arg2: memref<1x4x2x128xf32, #tpu.memory_space<vmem>>, %arg3: memref<1x8x128xf32, #tpu.memory_space<vmem>>, %arg4: memref<1x2x128xf32, #tpu.memory_space<vmem>>) attributes {dimension_semantics = [#tpu.dimension_semantics<parallel>, #tpu.dimension_semantics<arbitrary>], iteration_bounds = array<i64: 2, 1>, scalar_prefetch = 0 : i64, scratch_operands = 1 : i64, tpu.core_type = #tpu.core_type<tc>, window_params = [{transform_indices = @transform_0, window_bounds = array<i64: 1, 4, 2, 128>}, {transform_indices = @transform_1, window_bounds = array<i64: 1, 8, 128>}]} {
    %c0_i32 = arith.constant 0 : i32
    %0 = arith.cmpi eq, %arg1, %c0_i32 : i32
    %1 = arith.extui %0 : i1 to i32
    %c0_i32_0 = arith.constant 0 : i32
    %2 = arith.cmpi ne, %1, %c0_i32_0 : i32
    scf.if %2 {
      %cst_14 = arith.constant 0.000000e+00 : f32
      %26 = vector.broadcast %cst_14 : f32 to vector<1x2x128xf32>
      %c0_15 = arith.constant 0 : index
      %c0_16 = arith.constant 0 : index
      %c0_17 = arith.constant 0 : index
      %27 = vector.load %arg4[%c0_15, %c0_16, %c0_17] : memref<1x2x128xf32, #tpu.memory_space<vmem>>, vector<1x2x128xf32>
      tpu.vector_store %arg4[%c0_15, %c0_16, %c0_17], %26 {strides = array<i32>} : memref<1x2x128xf32, #tpu.memory_space<vmem>>, vector<1x2x128xf32>,
    } else {
    }
    %c0 = arith.constant 0 : index
    %c0_1 = arith.constant 0 : index
    %c0_2 = arith.constant 0 : index
    %c0_3 = arith.constant 0 : index
    %3 = vector.load %arg2[%c0, %c0_1, %c0_2, %c0_3] : memref<1x4x2x128xf32, #tpu.memory_space<vmem>>, vector<1x4x2x128xf32>
    %cst = arith.constant dense<0xFF800000> : vector<1x2x128xf32>
    %4 = vector.multi_reduction <maximumf>, %3, %cst [1] : vector<1x4x2x128xf32> to vector<1x2x128xf32>
    %5 = vector.shape_cast %4 : vector<1x2x128xf32> to vector<1x1x2x128xf32>
    %6 = vector.broadcast %5 : vector<1x1x2x128xf32> to vector<1x4x2x128xf32>
    %7 = arith.subf %3, %6 : vector<1x4x2x128xf32>
    %8 = math.exp %7 : vector<1x4x2x128xf32>
    %9 = vector.extract_strided_slice %8 {offsets = [0, 3, 0, 0], sizes = [1, 1, 2, 128], strides = [1, 1, 1, 1]} : vector<1x4x2x128xf32> to vector<1x1x2x128xf32>
    %10 = vector.shape_cast %9 : vector<1x1x2x128xf32> to vector<1x2x128xf32>
    %11 = vector.extract_strided_slice %8 {offsets = [0, 0, 0, 0], sizes = [1, 3, 2, 128], strides = [1, 1, 1, 1]} : vector<1x4x2x128xf32> to vector<1x3x2x128xf32>
    %cst_4 = arith.constant dense<0.000000e+00> : vector<1x2x128xf32>
    %12 = vector.multi_reduction <add>, %11, %cst_4 [1] : vector<1x3x2x128xf32> to vector<1x2x128xf32>
    %13 = arith.addf %12, %10 : vector<1x2x128xf32>
    %14 = math.log %13 : vector<1x2x128xf32>
    %cst_5 = arith.constant 1.000000e-10 : f32
    %15 = vector.broadcast %cst_5 : f32 to vector<1x2x128xf32>
    %16 = arith.mulf %15, %13 : vector<1x2x128xf32>
    %17 = arith.addf %12, %16 : vector<1x2x128xf32>
    %18 = math.log %17 : vector<1x2x128xf32>
    %19 = arith.subf %14, %18 : vector<1x2x128xf32>
    %c0_6 = arith.constant 0 : index
    %c0_7 = arith.constant 0 : index
    %c0_8 = arith.constant 0 : index
    %20 = vector.load %arg4[%c0_6, %c0_7, %c0_8] : memref<1x2x128xf32, #tpu.memory_space<vmem>>, vector<1x2x128xf32>
    %21 = arith.addf %20, %19 : vector<1x2x128xf32>
    %c0_9 = arith.constant 0 : index
    %c0_10 = arith.constant 0 : index
    %c0_11 = arith.constant 0 : index
    %22 = vector.load %arg4[%c0_9, %c0_10, %c0_11] : memref<1x2x128xf32, #tpu.memory_space<vmem>>, vector<1x2x128xf32>
    tpu.vector_store %arg4[%c0_9, %c0_10, %c0_11], %21 {strides = array<i32>} : memref<1x2x128xf32, #tpu.memory_space<vmem>>, vector<1x2x128xf32>,
    %c0_i32_12 = arith.constant 0 : i32
    %23 = arith.cmpi eq, %arg1, %c0_i32_12 : i32
    %24 = arith.extui %23 : i1 to i32
    %c0_i32_13 = arith.constant 0 : i32
    %25 = arith.cmpi ne, %24, %c0_i32_13 : i32
    scf.if %25 {
      %c0_14 = arith.constant 0 : index
      %c0_15 = arith.constant 0 : index
      %c0_16 = arith.constant 0 : index
      %26 = vector.load %arg4[%c0_14, %c0_15, %c0_16] : memref<1x2x128xf32, #tpu.memory_space<vmem>>, vector<1x2x128xf32>
      %27 = vector.shape_cast %26 : vector<1x2x128xf32> to vector<1x1x2x128xf32>
      %cst_17 = arith.constant dense<0.000000e+00> : vector<1xf32>
      %28 = vector.multi_reduction <add>, %27, %cst_17 [1, 2, 3] : vector<1x1x2x128xf32> to vector<1xf32>
      %29 = vector.shape_cast %28 : vector<1xf32> to vector<1x1x1x1xf32>
      %30 = vector.extract %29[0, 0, 0, 0] : f32 from vector<1x1x1x1xf32>
      %31 = vector.broadcast %30 : f32 to vector<1x8x128xf32>
      %c0_18 = arith.constant 0 : index
      %c0_19 = arith.constant 0 : index
      %c0_20 = arith.constant 0 : index
      %32 = vector.load %arg3[%c0_18, %c0_19, %c0_20] : memref<1x8x128xf32, #tpu.memory_space<vmem>>, vector<1x8x128xf32>
      tpu.vector_store %arg3[%c0_18, %c0_19, %c0_20], %31 {strides = array<i32>} : memref<1x8x128xf32, #tpu.memory_space<vmem>>, vector<1x8x128xf32>,
    } else {
    }
    return
  }
  func.func @transform_0(%arg0: i32, %arg1: i32) -> (i32, i32, i32, i32) {
    %c0_i32 = arith.constant 0 : i32
    %c0_i32_0 = arith.constant 0 : i32
    %c0_i32_1 = arith.constant 0 : i32
    return %arg0, %c0_i32, %arg1, %c0_i32_0 : i32, i32, i32, i32
  }
  func.func @transform_1(%arg0: i32, %arg1: i32) -> (i32, i32, i32) {
    %c0_i32 = arith.constant 0 : i32
    %c0_i32_0 = arith.constant 0 : i32
    %c0_i32_1 = arith.constant 0 : i32
    return %arg0, %c0_i32, %c0_i32_0 : i32, i32, i32
  }
}

</mosaic_0001>

<llo_original>
// kernel: tpu_custom_call.1
$region0: #{tpu_custom_call.1}
  #allocation0 [shape = 'u32[]', space=smem, size = 0x4, offset = 0x4, fixed_abs, tag = 'smem constant byte address 0x4 - core index']
  #allocation1 [shape = 'u32[144,128]{1,0:T(1,128)}', space=vmem, size = 0x12000, scoped, tag = 'internal scratch']
  #allocation2 [shape = 'f32[1,2,128]{2,1,0:T(2,128)}', space=vmem, size = 0x400, scoped, tag = 'scratch operand']
  %s0 = inlined_call_operand.hbm [shape: f32[2,4,2,128], index: 0, kind: input, shape index: {}]
  %s1 = inlined_call_operand.hbm [shape: f32[2,8,128], index: 1, kind: output, shape index: {}]
  %s2 = sld [smem:[#allocation0]]
  $region49: #{tpu_custom_call.1} parent=0
    _
  %s4 = ssub.s32 1, %s2
  %s5 = scalar_select 0, %s4, %s2
  $region1: #{tpu_custom_call.1} parent=0
    #allocation3 [shape = 'u8[8192]{0}', space=vmem, size = 0x2000, scoped, tag = 'input window, operand 0']
    #allocation4 [shape = 's32[2]{0}', space=sflag, size = 0x8, scoped, tag = 'scoped memory for tpu_custom_call.1']
    #allocation5 [shape = 's32[2]{0}', space=sflag, size = 0x8, scoped, tag = 'scoped memory for tpu_custom_call.1']
    #allocation6 [shape = 'u8[8192]{0}', space=vmem, size = 0x2000, scoped, tag = 'output window, operand 0']
    %6 = vsyncpa [#allocation4], 0
    %s7 = scalar_lea.sflag [#allocation4], 1
    %8 = vsyncpa %s7, 0
    %9 = vsyncpa [#allocation5], 0
    %s10 = scalar_lea.sflag [#allocation5], 1
    %11 = vsyncpa %s10, 0
    loop: start=0, step=1, limit=4
    $region2: #{tpu_custom_call.1} parent=1 // loop_pre_header
      _
    $region3: #{tpu_custom_call.1} parent=1 // loop_header
      %s13 = sphi 0, %s17
      %p14 = scmp.ge.s32.totalorder %s13, 4
      %s20 = sphi 0, %s32
      %s21 = sphi 0, %s28
      %s22 = sphi 0, %s20
      %s23 = sphi 0, %s21
      %s24 = sphi 0, %s22
      %s25 = sphi 0, %s23
      %s37 = sphi 0, %s39
      %s40 = sphi 0, %s37
      %s41 = sphi 0, %s40
      %s57 = sphi 0, %s41
      %s63 = sphi 0, %s65
      %s66 = sphi 0, %s63
      %s67 = sphi 0, %s66
      %s83 = sphi 0, %s67
    $region4: #{tpu_custom_call.1} parent=1 // loop_header_branch
      %16 = sbr.rel (%p14) target = $region8
    $region5: #{tpu_custom_call.1} parent=1 // loop_body
      %s18 = ssub.s32 %s13, 1
      %s19 = ssub.s32 %s13, 2
      %s26 = sadd.s32 1, %s21
      %p27 = scmp.ge.s32.totalorder %s26, 1
      %s28 = scalar_select %p27, 0, %s26
      %s29 = sadd.s32 1, %s20
      %s30 = scalar_select %p27, %s29, %s20
      %p31 = scmp.ge.s32.totalorder %s30, 2
      %s32 = scalar_select %p31, 0, %s30
      %s33 = ssub.s32 %s20, %s32
      %s34 = ssub.s32 %s21, %s28
      %s35 = sor.u32 %s33, %s34
      %p36 = scmp.eq.s32.totalorder %s35, 0
      %s38 = sadd.s32 %s37, 1
      %s39 = scalar_select %p36, %s37, %s38
      %p42 = pneg %p36
      %p43 = scmp.eq.s32.totalorder %s13, 1
      %p44 = por %p42, %p43
      %p45 = scmp.ne.s32.totalorder %s37, %s40
      %p46 = scmp.eq.s32.totalorder %s13, 0
      %p47 = por %p45, %p46
      %p48 = scmp.ne.s32.totalorder %s37, %s40
      %p49 = scmp.eq.s32.totalorder %s18, 1
      %p50 = por %p48, %p49
      %p51 = scmp.ne.s32.totalorder %s40, %s41
      %p52 = scmp.eq.s32.totalorder %s18, 0
      %p53 = por %p51, %p52
      %p54 = scmp.ne.s32.totalorder %s40, %s41
      %p55 = scmp.eq.s32.totalorder %s19, 1
      %p56 = por %p54, %p55
      %p58 = scmp.ne.s32.totalorder %s41, %s57
      %p59 = scmp.eq.s32.totalorder %s19, 0
      %p60 = por %p58, %p59
      %s61 = ssub.s32 %s20, %s32
      %p62 = scmp.eq.s32.totalorder %s61, 0
      %s64 = sadd.s32 %s63, 1
      %s65 = scalar_select %p62, %s63, %s64
      %p68 = pneg %p62
      %p69 = scmp.eq.s32.totalorder %s13, 1
      %p70 = por %p68, %p69
      %p71 = scmp.ne.s32.totalorder %s63, %s66
      %p72 = scmp.eq.s32.totalorder %s13, 0
      %p73 = por %p71, %p72
      %p74 = scmp.ne.s32.totalorder %s63, %s66
      %p75 = scmp.eq.s32.totalorder %s18, 1
      %p76 = por %p74, %p75
      %p77 = scmp.ne.s32.totalorder %s66, %s67
      %p78 = scmp.eq.s32.totalorder %s18, 0
      %p79 = por %p77, %p78
      %p80 = scmp.ne.s32.totalorder %s66, %s67
      %p81 = scmp.eq.s32.totalorder %s19, 1
      %p82 = por %p80, %p81
      %p84 = scmp.ne.s32.totalorder %s67, %s83
      %p85 = scmp.eq.s32.totalorder %s19, 0
      %p86 = por %p84, %p85
      %p87 = scmp.le.s32.totalorder 1, %s13
      %p88 = scmp.lt.s32.totalorder %s13, 3
      %p89 = pnand %p87, %p88
      %p90 = pneg %p89
      // Predicated region
      $region9: #{tpu_custom_call.1} parent=5 // pred_check
        _
      $region10: #{tpu_custom_call.1} parent=5 // pred_check_branch
        %92 = sbr.rel (%p89) target = $region12
      $region11: #{tpu_custom_call.1} parent=5 // pred_region
        %s93 = ssub.s32 %s13, 1
      $region12: #{tpu_custom_call.1} parent=5 // pred_fallthru
        _
      %p94 = scmp.lt.s32.totalorder %s13, 2
      // Predicated region
      $region13: #{tpu_custom_call.1} parent=5 // pred_check
        %p95 = pneg %p94
      $region14: #{tpu_custom_call.1} parent=5 // pred_check_branch
        %97 = sbr.rel (%p95) target = $region16
      $region15: #{tpu_custom_call.1} parent=5 // pred_region
        // Predicated region
        $region17: #{tpu_custom_call.1} parent=15 // pred_check
          %p98 = pneg %p47
        $region18: #{tpu_custom_call.1} parent=15 // pred_check_branch
          %100 = sbr.rel (%p98) target = $region20
        $region19: #{tpu_custom_call.1} parent=15 // pred_region
          %s101 = sand.u32 %s37, 1
          %s102 = scalar_lea.sflag [#allocation4], %s101
          %s103 = sand.u32 %s37, 1
          %s104 = smul.addr %s103, 8
          %s105 = scalar_lea.vmem [#allocation3], %s104
          %s107 = ssub.s32 128, 128
          %108 = vsyncadd %s102, %s107
          %s109 = smul.addr %s20, 4
          %s110 = sadd.s32 %s21, %s109
          %s111 = smul.addr %s110, 32
          %s112 = scalar_lea.hbm %s0, %s111
          %s113 = sshll.u32 %s105, 4
          %s114 = int_to_ptr.vmem [resolvable:$true] %s113
          %119 = dma.hbm_to_vmem [thread:$0]  %s112, 128, %s114, %s102, 32, 32, 2
        $region20: #{tpu_custom_call.1} parent=15 // pred_fallthru
          _
      $region16: #{tpu_custom_call.1} parent=5 // pred_fallthru
        _
      %p120 = scmp.le.s32.totalorder 1, %s13
      %p121 = scmp.lt.s32.totalorder %s13, 3
      %p122 = pnand %p120, %p121
      %p123 = pneg %p122
      // Predicated region
      $region21: #{tpu_custom_call.1} parent=5 // pred_check
        _
      $region22: #{tpu_custom_call.1} parent=5 // pred_check_branch
        %125 = sbr.rel (%p122) target = $region24
      $region23: #{tpu_custom_call.1} parent=5 // pred_region
        %s126 = ssub.s32 %s13, 1
        %s127 = sand.u32 %s40, 1
        %s128 = scalar_lea.sflag [#allocation4], %s127
        %s129 = sand.u32 %s40, 1
        %s130 = smul.addr %s129, 8
        %s131 = scalar_lea.vmem [#allocation3], %s130
        // Predicated region
        $region25: #{tpu_custom_call.1} parent=23 // pred_check
          %p132 = pneg %p53
        $region26: #{tpu_custom_call.1} parent=23 // pred_check_branch
          %134 = sbr.rel (%p132) target = $region28
        $region27: #{tpu_custom_call.1} parent=23 // pred_region
          %135 = dma.done %s128, 128
        $region28: #{tpu_custom_call.1} parent=23 // pred_fallthru
          _
        %s136 = sand.u32 %s40, 1
        %s137 = scalar_lea.sflag [#allocation4], %s136
        %s138 = sand.u32 %s40, 1
        %s139 = smul.addr %s138, 8
        %s140 = scalar_lea.vmem [#allocation3], %s139
        %p141 = pneg %p53
        %p142 = pneg %p50
        %p143 = pneg %p79
        %p144 = pneg %p76
        %s145 = sand.u32 %s66, 1
        %s146 = scalar_lea.sflag [#allocation5], %s145
        %s147 = sand.u32 %s66, 1
        %s148 = smul.addr %s147, 8
        %s149 = scalar_lea.vmem [#allocation6], %s148
        %p150 = scmp.eq.s32.totalorder %s23, 0
        // Predicated region
        $region29: #{tpu_custom_call.1} parent=23 // pred_check
          %p151 = pneg %p150
        $region30: #{tpu_custom_call.1} parent=23 // pred_check_branch
          %153 = sbr.rel (%p151) target = $region32
        $region31: #{tpu_custom_call.1} parent=23 // pred_region
          %154 = vst [vmem:[#allocation2] sm:$0x3] 0.0
        $region32: #{tpu_custom_call.1} parent=23 // pred_fallthru
          _
        %v155 = vld [vmem:[%s131] sm:$0x3]
        %v156 = vld [vmem:[%s131 + $0x2] sm:$0x3]
        %v157 = vld [vmem:[%s131 + $0x4] sm:$0x3]
        %v158 = vld [vmem:[%s131 + $0x6] sm:$0x3]
        %vm159 = vcmask 1041408
        %v160 = vsel %vm159, %v155, -inf
        %v161 = vsel %vm159, %v156, -inf
        %v162 = vsel %vm159, %v157, -inf
        %v163 = vsel %vm159, %v158, -inf
        %v164 = vmax.f32 %v160, %v161
        %v165 = vmax.f32 %v162, %v163
        %v166 = vmax.f32 %v164, %v165
        %v167 = vsub.f32 %v155, %v166
        %v168 = vsub.f32 %v156, %v166
        %v169 = vsub.f32 %v157, %v166
        %v170 = vsub.f32 %v158, %v166
        %v171 = vmul.f32 %v167, 1.442695
        %v172 = vpow.pop %v171
        %v173 = vmul.f32 %v168, 1.442695
        %v174 = vpow.pop %v173
        %v175 = vmul.f32 %v169, 1.442695
        %v176 = vpow.pop %v175
        %v177 = vmul.f32 %v170, 1.442695
        %v178 = vpow.pop %v177
        %v179 = vsel %vm159, %v172, 0.0
        %v180 = vsel %vm159, %v174, 0.0
        %v181 = vadd.f32 %v179, %v180
        %v182 = vsel %vm159, %v176, 0.0
        %v183 = vadd.f32 %v181, %v182
        %v184 = vadd.f32 %v183, %v178
        %v185 = vlog2.pop %v184
        %v186 = vmul.f32 %v185, 0.6931472
        %v187 = vmul.f32 %v184, 1e-10
        %v188 = vadd.f32 %v183, %v187
        %v189 = vlog2.pop %v188
        %v190 = vmul.f32 %v189, 0.6931472
        %v191 = vsub.f32 %v186, %v190
        %v192 = vld [vmem:[#allocation2] sm:$0x3]
        %v193 = vadd.f32 %v192, %v191
        %194 = vst [vmem:[#allocation2] sm:$0x3] %v193
        // Predicated region
        $region33: #{tpu_custom_call.1} parent=23 // pred_check
          %p195 = pneg %p150
        $region34: #{tpu_custom_call.1} parent=23 // pred_check_branch
          %197 = sbr.rel (%p195) target = $region36
        $region35: #{tpu_custom_call.1} parent=23 // pred_region
          %v198 = vld [vmem:[#allocation2] sm:$0x3]
          %v199 = vsel %vm159, %v198, 0.0
          %200 = vadd.xlane.f32.xlu0 %v199
          %v201 = vpop.xlane.xlu0 %200
          %v202 = vrot.slane %v201, 4
          %v203 = vadd.f32 %v201, %v202
          %v204 = vrot.slane %v203, 2
          %v205 = vadd.f32 %v203, %v204
          %v206 = vrot.slane %v205, 1
          %v207 = vadd.f32 %v205, %v206
          %s208 = vtos %v207
          %v209 = vstv %s208
          %210 = vst [vmem:[%s149] sm:$0xff] %v209
        $region36: #{tpu_custom_call.1} parent=23 // pred_fallthru
          _
        %s211 = sand.u32 %s66, 1
        %s212 = scalar_lea.sflag [#allocation5], %s211
        %s213 = sand.u32 %s66, 1
        %s214 = smul.addr %s213, 8
        %s215 = scalar_lea.vmem [#allocation6], %s214
        // Predicated region
        $region37: #{tpu_custom_call.1} parent=23 // pred_check
          %p216 = pneg %p76
        $region38: #{tpu_custom_call.1} parent=23 // pred_check_branch
          %218 = sbr.rel (%p216) target = $region40
        $region39: #{tpu_custom_call.1} parent=23 // pred_region
          %s220 = ssub.s32 128, 128
          %221 = vsyncadd %s212, %s220
          %s222 = smul.addr %s22, 128
          %s223 = scalar_lea.hbm %s1, %s222
          %s225 = sshll.u32 %s215, 4
          %s226 = int_to_ptr.vmem [resolvable:$true] %s225
          %228 = dma.vmem_to_hbm [thread:$0]  %s226, 128, %s223, %s212
        $region40: #{tpu_custom_call.1} parent=23 // pred_fallthru
          _
      $region24: #{tpu_custom_call.1} parent=5 // pred_fallthru
        _
      %p229 = scmp.le.s32.totalorder 2, %s13
      // Predicated region
      $region41: #{tpu_custom_call.1} parent=5 // pred_check
        %p230 = pneg %p229
      $region42: #{tpu_custom_call.1} parent=5 // pred_check_branch
        %232 = sbr.rel (%p230) target = $region44
      $region43: #{tpu_custom_call.1} parent=5 // pred_region
        %s233 = ssub.s32 %s13, 2
        // Predicated region
        $region45: #{tpu_custom_call.1} parent=43 // pred_check
          %p234 = pneg %p82
        $region46: #{tpu_custom_call.1} parent=43 // pred_check_branch
          %236 = sbr.rel (%p234) target = $region48
        $region47: #{tpu_custom_call.1} parent=43 // pred_region
          %s237 = sand.u32 %s67, 1
          %s238 = scalar_lea.sflag [#allocation5], %s237
          %s239 = sand.u32 %s67, 1
          %s240 = smul.addr %s239, 8
          %s241 = scalar_lea.vmem [#allocation6], %s240
          %242 = dma.done %s238, 128
        $region48: #{tpu_custom_call.1} parent=43 // pred_fallthru
          _
      $region44: #{tpu_custom_call.1} parent=5 // pred_fallthru
        _
    $region6: #{tpu_custom_call.1} parent=1 // loop_footer
      %s17 = sadd.s32 1, %s13
    $region7: #{tpu_custom_call.1} parent=1 // loop_footer_branch
      %12 = sbr.rel target = $region3
    $region8: #{tpu_custom_call.1} parent=1 // loop_exit
      _
    %243 = vsyncpa [#allocation4], 1
    %s244 = scalar_lea.sflag [#allocation4], 1
    %245 = vsyncpa %s244, 1
    %246 = vsyncpa [#allocation5], 1
    %s247 = scalar_lea.sflag [#allocation5], 1
    %248 = vsyncpa %s247, 1

</llo_original>
